<compile_context>
chip_gen: v7x
topology: tpu7x:2x2x1
jax: 0.10.0
libtpu: 0.0.40
codegen_flags: <defaults>
</compile_context>

<pallas_src>
import math
import functools

import jax
import jax.numpy as jnp
from jax import lax
from jax.experimental import pallas as pl
from jax.experimental.pallas import tpu as pltpu

EPS = 1e-5


def _round_up8(n: int) -> int:
    return ((n + 7) // 8) * 8


# ----------------------------------------------------------------------------
# Fused Pallas kernel: conv stack + dense + log_softmax for ONE image
# ----------------------------------------------------------------------------
def cnn_fused_kernel(*refs, H, W, Ks, Cins, Couts, roll_is_numpy):
    L = len(Ks)
    x_ref = refs[0]                       # (1, Cin0, H*W)
    conv_refs = refs[1:1 + 2 * L]         # (wmat, shift) per layer
    wfc_ref = refs[1 + 2 * L]             # (C_last, O, H*W)
    bfc_ref = refs[2 + 2 * L]             # (1, O)
    o_ref = refs[3 + 2 * L]               # (1, 1, O)
    patches_ref = refs[4 + 2 * L]         # (max K*K*cin_pad, H*W) VMEM scratch

    HW = H * W

    # Zero the im2col scratch once: per-tap channel-padding rows are read
    # (against zero weight columns) and must never hold uninitialized data.
    patches_ref[...] = jnp.zeros_like(patches_ref)

    # Lane-index helpers for the "same"-padding boundary masks.
    lin = lax.broadcasted_iota(jnp.int32, (1, HW), 1)
    h_idx = lin // W
    w_idx = lin - h_idx * W

    act = x_ref[0]                        # (Cin0, HW), lane dim = HW

    for l in range(L):
        w_ref, s_ref = conv_refs[2 * l], conv_refs[2 * l + 1]
        K, Cin, Cout = Ks[l], Cins[l], Couts[l]
        pad = K // 2
        cin_p = _round_up8(Cin)

        # 0/1 float lane masks: tap rows / cols that fall outside the image.
        mh = [jnp.logical_and(h_idx + (kh - pad) >= 0,
                              h_idx + (kh - pad) < H).astype(jnp.float32)
              for kh in range(K)]
        mw = [jnp.logical_and(w_idx + (kw - pad) >= 0,
                              w_idx + (kw - pad) < W).astype(jnp.float32)
              for kw in range(K)]

        # Build the im2col matrix: tap (kh, kw) reads act shifted by
        # d = dh*W + dw in the flattened HW index; out-of-image positions are
        # masked to zero (this *is* the 'same' zero padding).
        for kh in range(K):
            dh = kh - pad
            for kw in range(K):
                dw = kw - pad
                d = dh * W + dw
                s = ((-d) % HW) if roll_is_numpy else (d % HW)
                shifted = act if s == 0 else pltpu.roll(act, s, 1)
                t = kh * K + kw
                patches_ref[t * cin_p: t * cin_p + Cin, :] = (
                    shifted * (mh[kh] * mw[kw]))

        # One MXU matmul per conv layer: (Cout, K*K*cin_p) @ (K*K*cin_p, HW).
        P = patches_ref[0: K * K * cin_p, :]
        acc = jnp.dot(w_ref[...], P, preferred_element_type=jnp.float32)
        # Conv bias + BatchNorm(eval) folded into weight scale + shift.
        act = jnp.maximum(acc + s_ref[...], 0.0)          # (Cout, HW)

    # Dense layer over the NCHW flatten order + log_softmax, lane-oriented.
    # wfc_ref: (C_last, O, HW), act: (C_last, HW)
    prod = wfc_ref[...] * act[:, None, :]                  # (C_last, O, HW)
    per_chan = jnp.sum(prod, axis=2)                       # (C_last, O)
    logits = jnp.sum(per_chan, axis=0, keepdims=True) + bfc_ref[...]   # (1, O)
    mx = jnp.max(logits, axis=-1, keepdims=True)
    lse = jnp.log(jnp.sum(jnp.exp(logits - mx), axis=-1, keepdims=True)) + mx
    o_ref[...] = (logits - lse).reshape(o_ref.shape)


# ----------------------------------------------------------------------------
# pltpu.roll is documented to match jnp.roll; verify the convention once on
# device so a flip can never silently corrupt the convolution.
# ----------------------------------------------------------------------------
@functools.lru_cache(maxsize=None)
def _roll_is_numpy_convention() -> bool:
    def probe(x_ref, o_ref):
        o_ref[...] = pltpu.roll(x_ref[...], 1, 1)

    x = jnp.arange(128, dtype=jnp.float32).reshape(1, 128)
    y = pl.pallas_call(
        probe, out_shape=jax.ShapeDtypeStruct((1, 128), jnp.float32))(x)
    return bool(y[0, 1] == 0.0)          # np.roll([0,1,...], 1)[1] == 0


# ----------------------------------------------------------------------------
# Parameter preparation (done ONCE, outside the hot forward path)
# ----------------------------------------------------------------------------
def fold_params(conv_params, w_fc, b_fc):
    """Fold conv bias + BatchNorm(eval) into per-channel scale/shift, fold the
    scale into the conv weights, and lay weights out to match the in-kernel
    im2col row order (tap-major, channel-minor padded to 8)."""
    ws, ss, Ks, Cins, Couts = [], [], [], [], []
    for (w_oihw, b, gamma, beta, mean, var, K) in conv_params:
        Cout, Cin = int(w_oihw.shape[0]), int(w_oihw.shape[1])
        cin_p = _round_up8(Cin)
        scale = gamma * lax.rsqrt(var + EPS)                      # (Cout,)
        shift = beta + (b - mean) * scale                         # (Cout,)
        w_f = w_oihw * scale[:, None, None, None]                 # (Cout,Cin,K,K)
        w_t = jnp.transpose(w_f, (0, 2, 3, 1))                    # (Cout,K,K,Cin)
        w_t = jnp.pad(w_t, ((0, 0), (0, 0), (0, 0), (0, cin_p - Cin)))
        ws.append(w_t.reshape(Cout, K * K * cin_p).astype(jnp.float32))
        ss.append(shift.reshape(Cout, 1).astype(jnp.float32))
        Ks.append(K); Cins.append(Cin); Couts.append(Cout)

    C_last = Couts[-1]
    O, F = int(w_fc.shape[0]), int(w_fc.shape[1])
    HW = F // C_last
    # PyTorch Linear weight is (O, C*H*W) over the NCHW flatten -> (C, O, HW).
    wfc_cio = jnp.transpose(w_fc.reshape(O, C_last, HW),
                            (1, 0, 2)).astype(jnp.float32)
    bfc = b_fc.reshape(1, O).astype(jnp.float32)
    return (tuple(ws), tuple(ss), tuple(Ks), tuple(Cins), tuple(Couts),
            wfc_cio, bfc)


# ----------------------------------------------------------------------------
# Forward wrapper: one fused pallas_call
# ----------------------------------------------------------------------------
def make_cnn_forward(folded):
    ws, ss, Ks, Cins, Couts, wfc_cio, bfc = folded
    L = len(Ks)
    O = int(bfc.shape[-1])
    roll_is_numpy = _roll_is_numpy_convention()

    def bcast_spec(arr):
        if arr.ndim == 2:
            return pl.BlockSpec(arr.shape, lambda n: (0, 0))
        return pl.BlockSpec(arr.shape, lambda n: (0, 0, 0))

    def forward(x_nchw):
        N, C, H, W = x_nchw.shape
        HW = H * W
        # NCHW flatten of the last two dims: pure reshape, no transpose needed.
        x = x_nchw.reshape(N, C, HW).astype(jnp.float32)
        max_rows = max(Ks[i] * Ks[i] * _round_up8(Cins[i]) for i in range(L))

        kernel = functools.partial(
            cnn_fused_kernel, H=H, W=W, Ks=Ks, Cins=Cins, Couts=Couts,
            roll_is_numpy=roll_is_numpy)

        in_specs = [pl.BlockSpec((1, C, HW), lambda n: (n, 0, 0))]
        operands = [x]
        for l in range(L):
            in_specs += [bcast_spec(ws[l]), bcast_spec(ss[l])]
            operands += [ws[l], ss[l]]
        in_specs += [bcast_spec(wfc_cio), bcast_spec(bfc)]
        operands += [wfc_cio, bfc]

        out = pl.pallas_call(
            kernel,
            out_shape=jax.ShapeDtypeStruct((N, 1, O), jnp.float32),
            grid=(N,),
            in_specs=in_specs,
            out_specs=pl.BlockSpec((1, 1, O), lambda n: (n, 0, 0)),
            scratch_shapes=[pltpu.VMEM((max_rows, HW), jnp.float32)],
            compiler_params=pltpu.CompilerParams(
                dimension_semantics=("parallel",)),
        )(*operands)
        return out.reshape(N, O)

    return jax.jit(forward)


# ----------------------------------------------------------------------------
# Pure-JAX reference (NCHW, mirrors the PyTorch graph) for verification
# ----------------------------------------------------------------------------
def cnn_forward_ref(x_nchw, conv_params, w_fc, b_fc):
    y = x_nchw
    for (w_oihw, b, gamma, beta, mean, var, K) in conv_params:
        pad = K // 2
        y = lax.conv_general_dilated(
            y, w_oihw, window_strides=(1, 1),
            padding=[(pad, pad), (pad, pad)],
            dimension_numbers=('NCHW', 'OIHW', 'NCHW'))
        y = y + b[None, :, None, None]
        y = ((y - mean[None, :, None, None])
             * lax.rsqrt(var[None, :, None, None] + EPS)
             * gamma[None, :, None, None] + beta[None, :, None, None])
        y = jnp.maximum(y, 0.0)
    N = y.shape[0]
    flat = y.reshape(N, -1)
    logits = flat @ w_fc.T + b_fc
    return jax.nn.log_softmax(logits, axis=1)


# ----------------------------------------------------------------------------
# Deterministic parameter construction (mirrors the module's __init__ shapes)
# ----------------------------------------------------------------------------
def make_params(key, in_chans=3, out_chans=4, depth=3,
                kernel_sizes=(5, 7, 9), spatial=16, output_size=6):
    conv_params = []
    c_in, c_out = in_chans, out_chans
    for layer in range(depth):
        K = kernel_sizes[layer]
        key, k1, k2, k3, k4, k5, k6 = jax.random.split(key, 7)
        w = 0.1 * jax.random.normal(k1, (c_out, c_in, K, K), jnp.float32)  # OIHW
        b = 0.1 * jax.random.normal(k2, (c_out,), jnp.float32)
        gamma = 1.0 + 0.1 * jax.random.normal(k3, (c_out,), jnp.float32)
        beta = 0.1 * jax.random.normal(k4, (c_out,), jnp.float32)
        mean = 0.1 * jax.random.normal(k5, (c_out,), jnp.float32)
        var = 0.5 + jax.random.uniform(k6, (c_out,), jnp.float32)  # > 0
        conv_params.append((w, b, gamma, beta, mean, var, K))
        c_in = c_out
        c_out = math.floor(c_out * 1.5)
    dense_in = c_in * spatial * spatial
    key, k1, k2 = jax.random.split(key, 3)
    w_fc = 0.02 * jax.random.normal(k1, (output_size, dense_in), jnp.float32)
    b_fc = 0.1 * jax.random.normal(k2, (output_size,), jnp.float32)
    return conv_params, w_fc, b_fc


if __name__ == "__main__":
    key = jax.random.PRNGKey(0)
    key, xkey = jax.random.split(key)

    N, C, H, W = 2, 3, 16, 16            # input_shape=(N, 3, 16, 16)
    x = jax.random.normal(xkey, (N, C, H, W), jnp.float32)

    conv_params, w_fc, b_fc = make_params(key, spatial=H)

    # Weight folding / re-layout happens once, outside the forward pass.
    folded = fold_params(conv_params, w_fc, b_fc)
    forward = make_cnn_forward(folded)

    out = jax.block_until_ready(forward(x))
    ref = jax.block_until_ready(cnn_forward_ref(x, conv_params, w_fc, b_fc))

    assert out.shape == (N, 6), out.shape
    err = jnp.max(jnp.abs(out - ref))
    assert jnp.allclose(out, ref, atol=2e-3, rtol=2e-3), f"max abs diff {err}"
    print("KERNEL_OK")
</pallas_src>

<mosaic_0001>
module attributes {stable_mosaic.version = 11 : i64} {
  func.func @probe(%arg0: memref<1x128xf32, #tpu.memory_space<vmem>>, %arg1: memref<1x128xf32, #tpu.memory_space<vmem>>) attributes {dimension_semantics = [], scalar_prefetch = 0 : i64, scratch_operands = 0 : i64, tpu.core_type = #tpu.core_type<tc>} {
    %c0 = arith.constant 0 : index
    %c0_0 = arith.constant 0 : index
    %0 = vector.load %arg0[%c0, %c0_0] : memref<1x128xf32, #tpu.memory_space<vmem>>, vector<1x128xf32>
    %c1_i32 = arith.constant 1 : i32
    %1 = tpu.dynamic_rotate %0 by %c1_i32 dim 1 : vector<1x128xf32>, i32 -> vector<1x128xf32>
    %c0_1 = arith.constant 0 : index
    %c0_2 = arith.constant 0 : index
    %2 = vector.load %arg1[%c0_1, %c0_2] : memref<1x128xf32, #tpu.memory_space<vmem>>, vector<1x128xf32>
    tpu.vector_store %arg1[%c0_1, %c0_2], %1 {strides = array<i32>} : memref<1x128xf32, #tpu.memory_space<vmem>>, vector<1x128xf32>,
    return
  }
}

</mosaic_0001>

<llo_original>
// kernel: tpu_custom_call.1
$region0: #{tpu_custom_call.1}
  #allocation0 [shape = 'u32[]', space=smem, size = 0x4, offset = 0x4, fixed_abs, tag = 'smem constant byte address 0x4 - core index']
  #allocation1 [shape = 'u32[144,128]{1,0:T(1,128)}', space=vmem, size = 0x12000, scoped, tag = 'internal scratch']
  %s0 = inlined_call_operand.hbm [shape: f32[1,128], index: 0, kind: input, shape index: {}]
  %s1 = inlined_call_operand.hbm [shape: f32[1,128], index: 1, kind: output, shape index: {}]
  %s2 = sld [smem:[#allocation0]]
  $region18: #{tpu_custom_call.1} parent=0
    _
  %s4 = ssub.s32 1, %s2
  %s5 = scalar_select 0, %s4, %s2
  $region1: #{tpu_custom_call.1} parent=0
    #allocation2 [shape = 'u8[512]{0}', space=vmem, size = 0x400, scoped, tag = 'input window, operand 0, single buffered']
    #allocation3 [shape = 's32[1]{0}', space=sflag, size = 0x4, scoped, tag = 'scoped memory for tpu_custom_call.1']
    #allocation4 [shape = 's32[1]{0}', space=sflag, size = 0x4, scoped, tag = 'scoped memory for tpu_custom_call.1']
    #allocation5 [shape = 'u8[512]{0}', space=vmem, size = 0x400, scoped, tag = 'output window, operand 0, single buffered']
    %6 = vsyncpa [#allocation3], 0
    %7 = vsyncpa [#allocation4], 0
    // Predicated region
    $region2: #{tpu_custom_call.1} parent=1 // pred_check
      _
    $region3: #{tpu_custom_call.1} parent=1 // pred_check_branch
      %9 = sbr.rel (0) target = $region5
    $region4: #{tpu_custom_call.1} parent=1 // pred_region
      %s11 = ssub.s32 16, 16
      %12 = vsyncadd [#allocation3], %s11
      %s14 = sshll.u32 [#allocation2], 4
      %s15 = int_to_ptr.vmem [resolvable:$true] %s14
      %17 = dma.hbm_to_vmem [thread:$0]  %s0, 16, %s15, [#allocation3]
    $region5: #{tpu_custom_call.1} parent=1 // pred_fallthru
      _
    // Predicated region
    $region6: #{tpu_custom_call.1} parent=1 // pred_check
      _
    $region7: #{tpu_custom_call.1} parent=1 // pred_check_branch
      %19 = sbr.rel (0) target = $region9
    $region8: #{tpu_custom_call.1} parent=1 // pred_region
      %20 = dma.done [#allocation3], 16
    $region9: #{tpu_custom_call.1} parent=1 // pred_fallthru
      _
    %v21 = vld [vmem:[#allocation2] sm:$0x1]
    %22 = vrot.lane.b32.xlu0 %v21, 1
    %v23 = vpop.permute.xlu0 %22
    %24 = vst [vmem:[#allocation5] sm:$0x1] %v23
    // Predicated region
    $region10: #{tpu_custom_call.1} parent=1 // pred_check
      _
    $region11: #{tpu_custom_call.1} parent=1 // pred_check_branch
      %26 = sbr.rel (0) target = $region13
    $region12: #{tpu_custom_call.1} parent=1 // pred_region
      %s28 = ssub.s32 16, 16
      %29 = vsyncadd [#allocation4], %s28
      %s31 = sshll.u32 [#allocation5], 4
      %s32 = int_to_ptr.vmem [resolvable:$true] %s31
      %34 = dma.vmem_to_hbm [thread:$0]  %s32, 16, %s1, [#allocation4]
    $region13: #{tpu_custom_call.1} parent=1 // pred_fallthru
      _
    // Predicated region
    $region14: #{tpu_custom_call.1} parent=1 // pred_check
      _
    $region15: #{tpu_custom_call.1} parent=1 // pred_check_branch
      %36 = sbr.rel (0) target = $region17
    $region16: #{tpu_custom_call.1} parent=1 // pred_region
      %37 = dma.done [#allocation4], 16
    $region17: #{tpu_custom_call.1} parent=1 // pred_fallthru
      _
    %38 = vsyncpa [#allocation3], 1
    %39 = vsyncpa [#allocation4], 1

</llo_original>
